<compile_context>
chip_gen: v5e
topology: v5e:2x2
jax: 0.10.0
libtpu: 0.0.40
codegen_flags: <defaults>
</compile_context>

<pallas_src>
import functools

import jax
import jax.numpy as jnp
from jax import lax
from jax.experimental import pallas as pl
from jax.experimental.pallas import tpu as pltpu


def _encoder_kernel(x_ref, wih_ref, whh_ref, bsum_ref, wfe_ref, bfe_ref, eps_ref,
                    out_ref, hout_ref, hs_ref, *, num_ticks, K, hidden_dim):
    Bp = x_ref.shape[0]
    H = hidden_dim

    # Input projection folded into the kernel: xb = x @ Wih^T + (b_ih + b_hh).
    # One tiny extra MXU pass, removes an HBM write+read of xb outside the kernel.
    xb = jnp.dot(x_ref[...], wih_ref[...],
                 preferred_element_type=jnp.float32) + bsum_ref[...]        # (Bp, H)
    whh = whh_ref[...]                                                      # (H, H)

    # ---- Serial tick recurrence: per-tick critical path = MXU + tanh only. ----
    # h_{-1} = 0  =>  h_{-1} @ Whh^T = 0
    if num_ticks <= 16:
        # Short static trip count: fully unrolled, all scratch indices static.
        pre = jnp.zeros((Bp, H), jnp.float32)
        for t in range(num_ticks):
            h = jnp.tanh(xb + pre)                 # nn.RNNCell tanh update
            hs_ref[t] = h                          # stash h_t for the epilogue
            pre = jnp.dot(h, whh, preferred_element_type=jnp.float32)
    else:
        # Capped unroll for large num_ticks: keeps vreg live ranges bounded.
        def tick(t, pre):
            h = jnp.tanh(xb + pre)
            hs_ref[t] = h                          # dynamic leading-axis store
            return jnp.dot(h, whh, preferred_element_type=jnp.float32)
        lax.fori_loop(0, num_ticks, tick, jnp.zeros((Bp, H), jnp.float32), unroll=4)

    # ---- Batched epilogue: one matmul / one softplus / one bulk store. ----
    hs = hs_ref[...].reshape(num_ticks * Bp, H)    # tick-major rows (t*Bp + b)
    fe = jnp.dot(hs, wfe_ref[...],
                 preferred_element_type=jnp.float32) + bfe_ref[...]         # (T*Bp, 2K)
    mu = fe[:, :K]
    sig = jax.nn.softplus(fe[:, K:] - 5.0)
    z = eps_ref[...] * sig + mu                    # reparameterization: z = eps*sigma + mu

    out_ref[:, 0 * K:1 * K] = z                    # three whole-column stores total
    out_ref[:, 1 * K:2 * K] = mu
    out_ref[:, 2 * K:3 * K] = sig
    hout_ref[...] = hs_ref[num_ticks - 1]          # final hidden state, written once


def recurrent_encoder_forward(x, params, eps, *, num_ticks, K, hidden_dim):
    """Runs the recurrent encoder. Returns (zs, mus, L, hx) matching PyTorch shapes."""
    B, _ = x.shape
    H = hidden_dim

    # Pad batch to full sublane groups (multiple of 8); padded rows are sliced off.
    Bp = max(8, ((B + 7) // 8) * 8)
    padB = Bp - B
    xp = jnp.pad(x.astype(jnp.float32), ((0, padB), (0, 0)))
    epsp = jnp.pad(eps.astype(jnp.float32), ((0, 0), (0, padB), (0, 0)))
    epsp = epsp.reshape(num_ticks * Bp, K)         # row order matches epilogue (t*Bp + b)
    bsum = (params["bih"] + params["bhh"]).astype(jnp.float32)

    kernel = functools.partial(_encoder_kernel, num_ticks=num_ticks, K=K, hidden_dim=H)
    vmem = pl.BlockSpec(memory_space=pltpu.MemorySpace.VMEM)

    out, hout = pl.pallas_call(
        kernel,
        out_shape=(
            jax.ShapeDtypeStruct((num_ticks * Bp, 3 * K), jnp.float32),  # [z|mu|sig] slab
            jax.ShapeDtypeStruct((Bp, H), jnp.float32),                  # final hx
        ),
        in_specs=[vmem] * 7,
        out_specs=(vmem, vmem),
        scratch_shapes=[pltpu.VMEM((num_ticks, Bp, H), jnp.float32)],    # stacked h_t
        # Everything here is tiny; the limit is a guard if hidden_dim is scaled up
        # (v7x only has 64 MiB physical VMEM -> store weights in bf16 / tile Wfe then).
        compiler_params=pltpu.CompilerParams(vmem_limit_bytes=32 * 1024 * 1024),
    )(xp,
      params["wih"].astype(jnp.float32),
      params["whh"].astype(jnp.float32),
      bsum,
      params["wfe"].astype(jnp.float32),
      params["bfe"].astype(jnp.float32),
      epsp)

    # Single reshape + single transpose back to PyTorch's (B, K, num_ticks) stacking.
    out4 = out.reshape(num_ticks, Bp, 3, K)[:, :B]        # (T, B, 3, K)
    zml = jnp.transpose(out4, (2, 1, 3, 0))               # (3, B, K, T)
    return zml[0], zml[1], zml[2], hout[:B]


def _reference_forward(x, params, eps, *, num_ticks, K, hidden_dim):
    """Pure-JAX reference replicating the PyTorch loop (diag-cov RNN branch)."""
    B = x.shape[0]
    hx = jnp.zeros((B, hidden_dim), jnp.float32)
    zs, mus_l, sig_l = [], [], []
    for t in range(num_ticks):
        hx = jnp.tanh(x @ params["wih"] + params["bih"]
                      + hx @ params["whh"] + params["bhh"])
        fe = hx @ params["wfe"] + params["bfe"]
        mu = fe[:, :K]
        sig = jax.nn.softplus(fe[:, K:] - 5.0)
        z = eps[t] * sig + mu
        zs.append(z); mus_l.append(mu); sig_l.append(sig)
    return (jnp.stack(zs, -1), jnp.stack(mus_l, -1), jnp.stack(sig_l, -1), hx)


if __name__ == "__main__":
    # Small, module-consistent shapes.
    B, input_dim, hidden_dim, K, num_ticks = 4, 16, 32, 4, 8

    key = jax.random.PRNGKey(0)
    ks = jax.random.split(key, 8)
    scale = 1.0 / jnp.sqrt(hidden_dim)
    params = {
        # stored pre-transposed: (in, out)
        "wih": jax.random.uniform(ks[0], (input_dim, hidden_dim), jnp.float32, -scale, scale),
        "whh": jax.random.uniform(ks[1], (hidden_dim, hidden_dim), jnp.float32, -scale, scale),
        "bih": jax.random.uniform(ks[2], (1, hidden_dim), jnp.float32, -scale, scale),
        "bhh": jax.random.uniform(ks[3], (1, hidden_dim), jnp.float32, -scale, scale),
        "wfe": jax.random.uniform(ks[4], (hidden_dim, 2 * K), jnp.float32, -scale, scale),
        "bfe": jax.random.uniform(ks[5], (1, 2 * K), jnp.float32, -scale, scale),
    }
    x = jax.random.normal(ks[6], (B, input_dim), jnp.float32)
    # Reparameterization noise (torch.randn_like equivalent), precomputed for determinism.
    eps = jax.random.normal(ks[7], (num_ticks, B, K), jnp.float32)

    fwd = jax.jit(functools.partial(recurrent_encoder_forward,
                                    num_ticks=num_ticks, K=K, hidden_dim=hidden_dim))
    zs, mus, L, hx = jax.block_until_ready(fwd(x, params, eps))

    # Sanity check against the pure-JAX reference that mirrors the PyTorch loop.
    # Tolerance accounts for add reassociation (hoisted bias) plus the MXU's default
    # reduced-precision f32 passes.
    zs_r, mus_r, L_r, hx_r = _reference_forward(
        x, params, eps, num_ticks=num_ticks, K=K, hidden_dim=hidden_dim)
    assert zs.shape == (B, K, num_ticks) and mus.shape == (B, K, num_ticks)
    assert L.shape == (B, K, num_ticks) and hx.shape == (B, hidden_dim)
    assert jnp.allclose(zs, zs_r, rtol=1e-3, atol=1e-3), "zs mismatch"
    assert jnp.allclose(mus, mus_r, rtol=1e-3, atol=1e-3), "mus mismatch"
    assert jnp.allclose(L, L_r, rtol=1e-3, atol=1e-3), "sigmas mismatch"
    assert jnp.allclose(hx, hx_r, rtol=1e-3, atol=1e-3), "hx mismatch"

    print("KERNEL_OK")
</pallas_src>

<mosaic_0001>
module attributes {stable_mosaic.version = 11 : i64} {
  func.func @_encoder_kernel(%arg0: memref<8x16xf32, #tpu.memory_space<vmem>>, %arg1: memref<16x32xf32, #tpu.memory_space<vmem>>, %arg2: memref<32x32xf32, #tpu.memory_space<vmem>>, %arg3: memref<1x32xf32, #tpu.memory_space<vmem>>, %arg4: memref<32x8xf32, #tpu.memory_space<vmem>>, %arg5: memref<1x8xf32, #tpu.memory_space<vmem>>, %arg6: memref<64x4xf32, #tpu.memory_space<vmem>>, %arg7: memref<64x12xf32, #tpu.memory_space<vmem>>, %arg8: memref<8x32xf32, #tpu.memory_space<vmem>>, %arg9: memref<8x8x32xf32, #tpu.memory_space<vmem>>) attributes {dimension_semantics = [], scalar_prefetch = 0 : i64, scratch_operands = 1 : i64, tpu.core_type = #tpu.core_type<tc>} {
    %c0 = arith.constant 0 : index
    %c0_0 = arith.constant 0 : index
    %0 = vector.load %arg0[%c0, %c0_0] : memref<8x16xf32, #tpu.memory_space<vmem>>, vector<8x16xf32>
    %c0_1 = arith.constant 0 : index
    %c0_2 = arith.constant 0 : index
    %1 = vector.load %arg1[%c0_1, %c0_2] : memref<16x32xf32, #tpu.memory_space<vmem>>, vector<16x32xf32>
    %cst = arith.constant dense<0.000000e+00> : vector<8x32xf32>
    %2 = tpu.matmul %0, %1, %cst {dimension_numbers = #tpu.dot_dimension_numbers<[1], [0], [0], [1], [0, 0, 1, 1], [], []>} : vector<8x16xf32>, vector<16x32xf32>, vector<8x32xf32> -> vector<8x32xf32>
    %c0_3 = arith.constant 0 : index
    %c0_4 = arith.constant 0 : index
    %3 = vector.load %arg3[%c0_3, %c0_4] : memref<1x32xf32, #tpu.memory_space<vmem>>, vector<1x32xf32>
    %4 = vector.broadcast %3 : vector<1x32xf32> to vector<8x32xf32>
    %5 = arith.addf %2, %4 : vector<8x32xf32>
    %c0_5 = arith.constant 0 : index
    %c0_6 = arith.constant 0 : index
    %6 = vector.load %arg2[%c0_5, %c0_6] : memref<32x32xf32, #tpu.memory_space<vmem>>, vector<32x32xf32>
    %cst_7 = arith.constant 0.000000e+00 : f32
    %7 = vector.broadcast %cst_7 : f32 to vector<8x32xf32>
    %8 = arith.addf %5, %7 : vector<8x32xf32>
    %9 = math.tanh %8 : vector<8x32xf32>
    %c0_8 = arith.constant 0 : index
    %c0_9 = arith.constant 0 : index
    %c0_10 = arith.constant 0 : index
    %10 = vector.load %arg9[%c0_8, %c0_9, %c0_10] : memref<8x8x32xf32, #tpu.memory_space<vmem>>, vector<1x8x32xf32>
    %11 = vector.shape_cast %10 : vector<1x8x32xf32> to vector<8x32xf32>
    %12 = vector.shape_cast %9 : vector<8x32xf32> to vector<1x8x32xf32>
    tpu.vector_store %arg9[%c0_8, %c0_9, %c0_10], %12 {strides = array<i32>} : memref<8x8x32xf32, #tpu.memory_space<vmem>>, vector<1x8x32xf32>,
    %cst_11 = arith.constant dense<0.000000e+00> : vector<8x32xf32>
    %13 = tpu.matmul %9, %6, %cst_11 {dimension_numbers = #tpu.dot_dimension_numbers<[1], [0], [0], [1], [0, 0, 1, 1], [], []>} : vector<8x32xf32>, vector<32x32xf32>, vector<8x32xf32> -> vector<8x32xf32>
    %14 = arith.addf %5, %13 : vector<8x32xf32>
    %15 = math.tanh %14 : vector<8x32xf32>
    %c1 = arith.constant 1 : index
    %c0_12 = arith.constant 0 : index
    %c0_13 = arith.constant 0 : index
    %16 = vector.load %arg9[%c1, %c0_12, %c0_13] : memref<8x8x32xf32, #tpu.memory_space<vmem>>, vector<1x8x32xf32>
    %17 = vector.shape_cast %16 : vector<1x8x32xf32> to vector<8x32xf32>
    %18 = vector.shape_cast %15 : vector<8x32xf32> to vector<1x8x32xf32>
    tpu.vector_store %arg9[%c1, %c0_12, %c0_13], %18 {strides = array<i32>} : memref<8x8x32xf32, #tpu.memory_space<vmem>>, vector<1x8x32xf32>,
    %cst_14 = arith.constant dense<0.000000e+00> : vector<8x32xf32>
    %19 = tpu.matmul %15, %6, %cst_14 {dimension_numbers = #tpu.dot_dimension_numbers<[1], [0], [0], [1], [0, 0, 1, 1], [], []>} : vector<8x32xf32>, vector<32x32xf32>, vector<8x32xf32> -> vector<8x32xf32>
    %20 = arith.addf %5, %19 : vector<8x32xf32>
    %21 = math.tanh %20 : vector<8x32xf32>
    %c2 = arith.constant 2 : index
    %c0_15 = arith.constant 0 : index
    %c0_16 = arith.constant 0 : index
    %22 = vector.load %arg9[%c2, %c0_15, %c0_16] : memref<8x8x32xf32, #tpu.memory_space<vmem>>, vector<1x8x32xf32>
    %23 = vector.shape_cast %22 : vector<1x8x32xf32> to vector<8x32xf32>
    %24 = vector.shape_cast %21 : vector<8x32xf32> to vector<1x8x32xf32>
    tpu.vector_store %arg9[%c2, %c0_15, %c0_16], %24 {strides = array<i32>} : memref<8x8x32xf32, #tpu.memory_space<vmem>>, vector<1x8x32xf32>,
    %cst_17 = arith.constant dense<0.000000e+00> : vector<8x32xf32>
    %25 = tpu.matmul %21, %6, %cst_17 {dimension_numbers = #tpu.dot_dimension_numbers<[1], [0], [0], [1], [0, 0, 1, 1], [], []>} : vector<8x32xf32>, vector<32x32xf32>, vector<8x32xf32> -> vector<8x32xf32>
    %26 = arith.addf %5, %25 : vector<8x32xf32>
    %27 = math.tanh %26 : vector<8x32xf32>
    %c3 = arith.constant 3 : index
    %c0_18 = arith.constant 0 : index
    %c0_19 = arith.constant 0 : index
    %28 = vector.load %arg9[%c3, %c0_18, %c0_19] : memref<8x8x32xf32, #tpu.memory_space<vmem>>, vector<1x8x32xf32>
    %29 = vector.shape_cast %28 : vector<1x8x32xf32> to vector<8x32xf32>
    %30 = vector.shape_cast %27 : vector<8x32xf32> to vector<1x8x32xf32>
    tpu.vector_store %arg9[%c3, %c0_18, %c0_19], %30 {strides = array<i32>} : memref<8x8x32xf32, #tpu.memory_space<vmem>>, vector<1x8x32xf32>,
    %cst_20 = arith.constant dense<0.000000e+00> : vector<8x32xf32>
    %31 = tpu.matmul %27, %6, %cst_20 {dimension_numbers = #tpu.dot_dimension_numbers<[1], [0], [0], [1], [0, 0, 1, 1], [], []>} : vector<8x32xf32>, vector<32x32xf32>, vector<8x32xf32> -> vector<8x32xf32>
    %32 = arith.addf %5, %31 : vector<8x32xf32>
    %33 = math.tanh %32 : vector<8x32xf32>
    %c4 = arith.constant 4 : index
    %c0_21 = arith.constant 0 : index
    %c0_22 = arith.constant 0 : index
    %34 = vector.load %arg9[%c4, %c0_21, %c0_22] : memref<8x8x32xf32, #tpu.memory_space<vmem>>, vector<1x8x32xf32>
    %35 = vector.shape_cast %34 : vector<1x8x32xf32> to vector<8x32xf32>
    %36 = vector.shape_cast %33 : vector<8x32xf32> to vector<1x8x32xf32>
    tpu.vector_store %arg9[%c4, %c0_21, %c0_22], %36 {strides = array<i32>} : memref<8x8x32xf32, #tpu.memory_space<vmem>>, vector<1x8x32xf32>,
    %cst_23 = arith.constant dense<0.000000e+00> : vector<8x32xf32>
    %37 = tpu.matmul %33, %6, %cst_23 {dimension_numbers = #tpu.dot_dimension_numbers<[1], [0], [0], [1], [0, 0, 1, 1], [], []>} : vector<8x32xf32>, vector<32x32xf32>, vector<8x32xf32> -> vector<8x32xf32>
    %38 = arith.addf %5, %37 : vector<8x32xf32>
    %39 = math.tanh %38 : vector<8x32xf32>
    %c5 = arith.constant 5 : index
    %c0_24 = arith.constant 0 : index
    %c0_25 = arith.constant 0 : index
    %40 = vector.load %arg9[%c5, %c0_24, %c0_25] : memref<8x8x32xf32, #tpu.memory_space<vmem>>, vector<1x8x32xf32>
    %41 = vector.shape_cast %40 : vector<1x8x32xf32> to vector<8x32xf32>
    %42 = vector.shape_cast %39 : vector<8x32xf32> to vector<1x8x32xf32>
    tpu.vector_store %arg9[%c5, %c0_24, %c0_25], %42 {strides = array<i32>} : memref<8x8x32xf32, #tpu.memory_space<vmem>>, vector<1x8x32xf32>,
    %cst_26 = arith.constant dense<0.000000e+00> : vector<8x32xf32>
    %43 = tpu.matmul %39, %6, %cst_26 {dimension_numbers = #tpu.dot_dimension_numbers<[1], [0], [0], [1], [0, 0, 1, 1], [], []>} : vector<8x32xf32>, vector<32x32xf32>, vector<8x32xf32> -> vector<8x32xf32>
    %44 = arith.addf %5, %43 : vector<8x32xf32>
    %45 = math.tanh %44 : vector<8x32xf32>
    %c6 = arith.constant 6 : index
    %c0_27 = arith.constant 0 : index
    %c0_28 = arith.constant 0 : index
    %46 = vector.load %arg9[%c6, %c0_27, %c0_28] : memref<8x8x32xf32, #tpu.memory_space<vmem>>, vector<1x8x32xf32>
    %47 = vector.shape_cast %46 : vector<1x8x32xf32> to vector<8x32xf32>
    %48 = vector.shape_cast %45 : vector<8x32xf32> to vector<1x8x32xf32>
    tpu.vector_store %arg9[%c6, %c0_27, %c0_28], %48 {strides = array<i32>} : memref<8x8x32xf32, #tpu.memory_space<vmem>>, vector<1x8x32xf32>,
    %cst_29 = arith.constant dense<0.000000e+00> : vector<8x32xf32>
    %49 = tpu.matmul %45, %6, %cst_29 {dimension_numbers = #tpu.dot_dimension_numbers<[1], [0], [0], [1], [0, 0, 1, 1], [], []>} : vector<8x32xf32>, vector<32x32xf32>, vector<8x32xf32> -> vector<8x32xf32>
    %50 = arith.addf %5, %49 : vector<8x32xf32>
    %51 = math.tanh %50 : vector<8x32xf32>
    %c7 = arith.constant 7 : index
    %c0_30 = arith.constant 0 : index
    %c0_31 = arith.constant 0 : index
    %52 = vector.load %arg9[%c7, %c0_30, %c0_31] : memref<8x8x32xf32, #tpu.memory_space<vmem>>, vector<1x8x32xf32>
    %53 = vector.shape_cast %52 : vector<1x8x32xf32> to vector<8x32xf32>
    %54 = vector.shape_cast %51 : vector<8x32xf32> to vector<1x8x32xf32>
    tpu.vector_store %arg9[%c7, %c0_30, %c0_31], %54 {strides = array<i32>} : memref<8x8x32xf32, #tpu.memory_space<vmem>>, vector<1x8x32xf32>,
    %c0_32 = arith.constant 0 : index
    %c0_33 = arith.constant 0 : index
    %c0_34 = arith.constant 0 : index
    %55 = vector.load %arg9[%c0_32, %c0_33, %c0_34] : memref<8x8x32xf32, #tpu.memory_space<vmem>>, vector<8x8x32xf32>
    %56 = vector.shape_cast %55 : vector<8x8x32xf32> to vector<64x32xf32>
    %c0_35 = arith.constant 0 : index
    %c0_36 = arith.constant 0 : index
    %57 = vector.load %arg4[%c0_35, %c0_36] : memref<32x8xf32, #tpu.memory_space<vmem>>, vector<32x8xf32>
    %cst_37 = arith.constant dense<0.000000e+00> : vector<64x8xf32>
    %58 = tpu.matmul %56, %57, %cst_37 {dimension_numbers = #tpu.dot_dimension_numbers<[1], [0], [0], [1], [0, 0, 1, 1], [], []>} : vector<64x32xf32>, vector<32x8xf32>, vector<64x8xf32> -> vector<64x8xf32>
    %c0_38 = arith.constant 0 : index
    %c0_39 = arith.constant 0 : index
    %59 = vector.load %arg5[%c0_38, %c0_39] : memref<1x8xf32, #tpu.memory_space<vmem>>, vector<1x8xf32>
    %60 = vector.broadcast %59 : vector<1x8xf32> to vector<64x8xf32>
    %61 = arith.addf %58, %60 : vector<64x8xf32>
    %62 = vector.extract_strided_slice %61 {offsets = [0, 0], sizes = [64, 4], strides = [1, 1]} : vector<64x8xf32> to vector<64x4xf32>
    %63 = vector.extract_strided_slice %61 {offsets = [0, 4], sizes = [64, 4], strides = [1, 1]} : vector<64x8xf32> to vector<64x4xf32>
    %cst_40 = arith.constant 5.000000e+00 : f32
    %64 = vector.broadcast %cst_40 : f32 to vector<64x4xf32>
    %65 = arith.subf %63, %64 : vector<64x4xf32>
    %cst_41 = arith.constant 0.000000e+00 : f32
    %66 = vector.broadcast %cst_41 : f32 to vector<64x4xf32>
    %67 = arith.maximumf %65, %66 : vector<64x4xf32>
    %68 = vector.broadcast %cst_41 : f32 to vector<64x4xf32>
    %69 = arith.subf %65, %68 : vector<64x4xf32>
    %70 = arith.cmpf one, %69, %69 : vector<64x4xf32>
    %71 = vector.broadcast %cst_41 : f32 to vector<64x4xf32>
    %72 = arith.addf %65, %71 : vector<64x4xf32>
    %73 = math.absf %69 : vector<64x4xf32>
    %cst_42 = arith.constant 0.000000e+00 : f32
    %74 = vector.broadcast %cst_42 : f32 to vector<64x4xf32>
    %75 = arith.subf %74, %73 : vector<64x4xf32>
    %76 = math.exp %75 : vector<64x4xf32>
    %77 = math.log1p %76 : vector<64x4xf32>
    %78 = arith.addf %67, %77 : vector<64x4xf32>
    %79 = arith.select %70, %72, %78 : vector<64x4xi1>, vector<64x4xf32>
    %c0_43 = arith.constant 0 : index
    %c0_44 = arith.constant 0 : index
    %80 = vector.load %arg6[%c0_43, %c0_44] : memref<64x4xf32, #tpu.memory_space<vmem>>, vector<64x4xf32>
    %81 = arith.mulf %80, %79 : vector<64x4xf32>
    %82 = arith.addf %81, %62 : vector<64x4xf32>
    %c0_45 = arith.constant 0 : index
    %c0_46 = arith.constant 0 : index
    %83 = vector.load %arg7[%c0_45, %c0_46] : memref<64x12xf32, #tpu.memory_space<vmem>>, vector<64x4xf32>
    tpu.vector_store %arg7[%c0_45, %c0_46], %82 {strides = array<i32>} : memref<64x12xf32, #tpu.memory_space<vmem>>, vector<64x4xf32>,
    %c0_47 = arith.constant 0 : index
    %c4_48 = arith.constant 4 : index
    %84 = vector.load %arg7[%c0_47, %c4_48] : memref<64x12xf32, #tpu.memory_space<vmem>>, vector<64x4xf32>
    tpu.vector_store %arg7[%c0_47, %c4_48], %62 {strides = array<i32>} : memref<64x12xf32, #tpu.memory_space<vmem>>, vector<64x4xf32>,
    %c0_49 = arith.constant 0 : index
    %c8 = arith.constant 8 : index
    %85 = vector.load %arg7[%c0_49, %c8] : memref<64x12xf32, #tpu.memory_space<vmem>>, vector<64x4xf32>
    tpu.vector_store %arg7[%c0_49, %c8], %79 {strides = array<i32>} : memref<64x12xf32, #tpu.memory_space<vmem>>, vector<64x4xf32>,
    %c7_50 = arith.constant 7 : index
    %c0_51 = arith.constant 0 : index
    %c0_52 = arith.constant 0 : index
    %86 = vector.load %arg9[%c7_50, %c0_51, %c0_52] : memref<8x8x32xf32, #tpu.memory_space<vmem>>, vector<1x8x32xf32>
    %87 = vector.shape_cast %86 : vector<1x8x32xf32> to vector<8x32xf32>
    %c0_53 = arith.constant 0 : index
    %c0_54 = arith.constant 0 : index
    %88 = vector.load %arg8[%c0_53, %c0_54] : memref<8x32xf32, #tpu.memory_space<vmem>>, vector<8x32xf32>
    tpu.vector_store %arg8[%c0_53, %c0_54], %87 {strides = array<i32>} : memref<8x32xf32, #tpu.memory_space<vmem>>, vector<8x32xf32>,
    return
  }
}

</mosaic_0001>

<llo_original>
// kernel: recurrent_encoder_forward.1
$region0: #{recurrent_encoder_forward.1}
  #allocation0 [shape = 'u32[]', space=smem, size = 0x4, offset = 0x4, fixed_abs, tag = 'smem constant byte address 0x4 - core index']
  #allocation1 [shape = 'u32[72,128]{1,0:T(1,128)}', space=vmem, size = 0x9000, scoped, tag = 'internal scratch']
  #allocation2 [shape = 'f32[8,8,32]{2,1,0:T(8,128)}', space=vmem, size = 0x8000, scoped, tag = 'scratch operand']
  %s0 = inlined_call_operand.vmem [shape: f32[8,16], index: 0, kind: input, shape index: {}]
  %s1 = inlined_call_operand.vmem [shape: f32[16,32], index: 1, kind: input, shape index: {}]
  %s2 = inlined_call_operand.vmem [shape: f32[32,32], index: 2, kind: input, shape index: {}]
  %s3 = inlined_call_operand.vmem [shape: f32[1,32], index: 3, kind: input, shape index: {}]
  %s4 = inlined_call_operand.vmem [shape: f32[32,8], index: 4, kind: input, shape index: {}]
  %s5 = inlined_call_operand.vmem [shape: f32[1,8], index: 5, kind: input, shape index: {}]
  %s6 = inlined_call_operand.vmem [shape: f32[64,4], index: 6, kind: input, shape index: {}]
  %s7 = inlined_call_operand.vmem [shape: f32[64,12], index: 7, kind: output, shape index: {0}]
  %s8 = inlined_call_operand.vmem [shape: f32[8,32], index: 8, kind: output, shape index: {1}]
  %9 = xla_tuple %s7, %s8
  %s10 = sld [smem:[#allocation0]]
  $region46: #{recurrent_encoder_forward.1} parent=0
    _
  %s12 = ssub.s32 1, %s10
  %s13 = scalar_select 0, %s12, %s10
  // Predicated region
  $region2: #{recurrent_encoder_forward.1} parent=0 // pred_check
    _
  $region3: #{recurrent_encoder_forward.1} parent=0 // pred_check_branch
    %15 = sbr.rel (0) target = $region5
  $region4: #{recurrent_encoder_forward.1} parent=0 // pred_region
    _
  $region5: #{recurrent_encoder_forward.1} parent=0 // pred_fallthru
    _
  // Predicated region
  $region6: #{recurrent_encoder_forward.1} parent=0 // pred_check
    _
  $region7: #{recurrent_encoder_forward.1} parent=0 // pred_check_branch
    %17 = sbr.rel (0) target = $region9
  $region8: #{recurrent_encoder_forward.1} parent=0 // pred_region
    _
  $region9: #{recurrent_encoder_forward.1} parent=0 // pred_fallthru
    _
  // Predicated region
  $region10: #{recurrent_encoder_forward.1} parent=0 // pred_check
    _
  $region11: #{recurrent_encoder_forward.1} parent=0 // pred_check_branch
    %19 = sbr.rel (0) target = $region13
  $region12: #{recurrent_encoder_forward.1} parent=0 // pred_region
    _
  $region13: #{recurrent_encoder_forward.1} parent=0 // pred_fallthru
    _
  // Predicated region
  $region14: #{recurrent_encoder_forward.1} parent=0 // pred_check
    _
  $region15: #{recurrent_encoder_forward.1} parent=0 // pred_check_branch
    %21 = sbr.rel (0) target = $region17
  $region16: #{recurrent_encoder_forward.1} parent=0 // pred_region
    _
  $region17: #{recurrent_encoder_forward.1} parent=0 // pred_fallthru
    _
  // Predicated region
  $region18: #{recurrent_encoder_forward.1} parent=0 // pred_check
    _
  $region19: #{recurrent_encoder_forward.1} parent=0 // pred_check_branch
    %23 = sbr.rel (0) target = $region21
  $region20: #{recurrent_encoder_forward.1} parent=0 // pred_region
    _
  $region21: #{recurrent_encoder_forward.1} parent=0 // pred_fallthru
    _
  // Predicated region
  $region22: #{recurrent_encoder_forward.1} parent=0 // pred_check
    _
  $region23: #{recurrent_encoder_forward.1} parent=0 // pred_check_branch
    %25 = sbr.rel (0) target = $region25
  $region24: #{recurrent_encoder_forward.1} parent=0 // pred_region
    _
  $region25: #{recurrent_encoder_forward.1} parent=0 // pred_fallthru
    _
  // Predicated region
  $region26: #{recurrent_encoder_forward.1} parent=0 // pred_check
    _
  $region27: #{recurrent_encoder_forward.1} parent=0 // pred_check_branch
    %27 = sbr.rel (0) target = $region29
  $region28: #{recurrent_encoder_forward.1} parent=0 // pred_region
    _
  $region29: #{recurrent_encoder_forward.1} parent=0 // pred_fallthru
    _
  %v28 = vld [vmem:[%s0] sm:$0xff]
  %v29 = vld [vmem:[%s1] sm:$0xff]
  %v30 = vld [vmem:[%s1 + $0x8] sm:$0xff]
  %v31 = vld [vmem:[%s3] sm:$0x1]
  %v33 = vperm.slane %v31, 0
  %vm35 = vcmask 130048
  %v37 = vsel %vm35, %v28, 0
  %39 = vmatpush.msra.mxu0 0.0
  %40 = vmatpush.msra.mxu0 0.0
  %41 = vmatpush.msra.mxu0 0.0
  %42 = vmatpush.msra.mxu0 0.0
  %43 = vmatpush.msra.mxu0 0.0
  %44 = vmatpush.msra.mxu0 0.0
  %45 = vmatpush.msra.mxu0 0.0
  %46 = vmatpush.msra.mxu0 0.0
  %47 = vmatpush.msra.mxu0 0.0
  %48 = vmatpush.msra.mxu0 0.0
  %49 = vmatpush.msra.mxu0 0.0
  %50 = vmatpush.msra.mxu0 0.0
  %51 = vmatpush.msra.mxu0 0.0
  %52 = vmatpush.msra.mxu0 0.0
  %53 = vmatpush.msra.mxu0 %v30
  %54 = vmatpush.msra.mxu0 %v29
  %55 = vmatmul.f32.gmra.mxu0 %v37
  %v56 = vpop.f32.mrf.mxu0
  %v57 = vadd.f32 %v33, %v56
  %58 = vdwg.mxu0
  %v59 = vld [vmem:[%s2] sm:$0xff]
  %v60 = vld [vmem:[%s2 + $0x8] sm:$0xff]
  %v61 = vld [vmem:[%s2 + $0x10] sm:$0xff]
  %v62 = vld [vmem:[%s2 + $0x18] sm:$0xff]
  %v63 = vadd.f32 %v57, 0.0
  %v64 = vtanh.pop %v63
  %vm65 = vcmask 261120
  %66 = vst.msk [vmem:[#allocation2] sm:$0xff] %vm65, %v64
  %v68 = vsel %vm65, %v64, 0
  %70 = vmatpush.msra.mxu0 0.0
  %71 = vmatpush.msra.mxu0 0.0
  %72 = vmatpush.msra.mxu0 0.0
  %73 = vmatpush.msra.mxu0 0.0
  %74 = vmatpush.msra.mxu0 0.0
  %75 = vmatpush.msra.mxu0 0.0
  %76 = vmatpush.msra.mxu0 0.0
  %77 = vmatpush.msra.mxu0 0.0
  %78 = vmatpush.msra.mxu0 0.0
  %79 = vmatpush.msra.mxu0 0.0
  %80 = vmatpush.msra.mxu0 0.0
  %81 = vmatpush.msra.mxu0 0.0
  %82 = vmatpush.msra.mxu0 %v62
  %83 = vmatpush.msra.mxu0 %v61
  %84 = vmatpush.msra.mxu0 %v60
  %85 = vmatpush.msra.mxu0 %v59
  %86 = vmatmul.f32.gmra.mxu0 %v68
  %v87 = vpop.f32.mrf.mxu0
  %v88 = vadd.f32 0.0, %v87
  %89 = vdwg.mxu0
  %v90 = vadd.f32 %v57, %v88
  %v91 = vtanh.pop %v90
  %s92 = scalar_lea.vmem [#allocation2], 8
  %93 = vst.msk [vmem:[%s92] sm:$0xff] %vm65, %v91
  %v95 = vsel %vm65, %v91, 0
  %97 = vmatpush.msra.mxu0 0.0
  %98 = vmatpush.msra.mxu0 0.0
  %99 = vmatpush.msra.mxu0 0.0
  %100 = vmatpush.msra.mxu0 0.0
  %101 = vmatpush.msra.mxu0 0.0
  %102 = vmatpush.msra.mxu0 0.0
  %103 = vmatpush.msra.mxu0 0.0
  %104 = vmatpush.msra.mxu0 0.0
  %105 = vmatpush.msra.mxu0 0.0
  %106 = vmatpush.msra.mxu0 0.0
  %107 = vmatpush.msra.mxu0 0.0
  %108 = vmatpush.msra.mxu0 0.0
  %109 = vmatpush.msra.mxu0 %v62
  %110 = vmatpush.msra.mxu0 %v61
  %111 = vmatpush.msra.mxu0 %v60
  %112 = vmatpush.msra.mxu0 %v59
  %113 = vmatmul.f32.gmra.mxu0 %v95
  %v114 = vpop.f32.mrf.mxu0
  %v115 = vadd.f32 0.0, %v114
  %116 = vdwg.mxu0
  %v117 = vadd.f32 %v57, %v115
  %v118 = vtanh.pop %v117
  %s119 = scalar_lea.vmem [#allocation2], 16
  %120 = vst.msk [vmem:[%s119] sm:$0xff] %vm65, %v118
  %v122 = vsel %vm65, %v118, 0
  %124 = vmatpush.msra.mxu0 0.0
  %125 = vmatpush.msra.mxu0 0.0
  %126 = vmatpush.msra.mxu0 0.0
  %127 = vmatpush.msra.mxu0 0.0
  %128 = vmatpush.msra.mxu0 0.0
  %129 = vmatpush.msra.mxu0 0.0
  %130 = vmatpush.msra.mxu0 0.0
  %131 = vmatpush.msra.mxu0 0.0
  %132 = vmatpush.msra.mxu0 0.0
  %133 = vmatpush.msra.mxu0 0.0
  %134 = vmatpush.msra.mxu0 0.0
  %135 = vmatpush.msra.mxu0 0.0
  %136 = vmatpush.msra.mxu0 %v62
  %137 = vmatpush.msra.mxu0 %v61
  %138 = vmatpush.msra.mxu0 %v60
  %139 = vmatpush.msra.mxu0 %v59
  %140 = vmatmul.f32.gmra.mxu0 %v122
  %v141 = vpop.f32.mrf.mxu0
  %v142 = vadd.f32 0.0, %v141
  %143 = vdwg.mxu0
  %v144 = vadd.f32 %v57, %v142
  %v145 = vtanh.pop %v144
  %s146 = scalar_lea.vmem [#allocation2], 24
  %147 = vst.msk [vmem:[%s146] sm:$0xff] %vm65, %v145
  %v149 = vsel %vm65, %v145, 0
  %151 = vmatpush.msra.mxu0 0.0
  %152 = vmatpush.msra.mxu0 0.0
  %153 = vmatpush.msra.mxu0 0.0
  %154 = vmatpush.msra.mxu0 0.0
  %155 = vmatpush.msra.mxu0 0.0
  %156 = vmatpush.msra.mxu0 0.0
  %157 = vmatpush.msra.mxu0 0.0
  %158 = vmatpush.msra.mxu0 0.0
  %159 = vmatpush.msra.mxu0 0.0
  %160 = vmatpush.msra.mxu0 0.0
  %161 = vmatpush.msra.mxu0 0.0
  %162 = vmatpush.msra.mxu0 0.0
  %163 = vmatpush.msra.mxu0 %v62
  %164 = vmatpush.msra.mxu0 %v61
  %165 = vmatpush.msra.mxu0 %v60
  %166 = vmatpush.msra.mxu0 %v59
  %167 = vmatmul.f32.gmra.mxu0 %v149
  %v168 = vpop.f32.mrf.mxu0
  %v169 = vadd.f32 0.0, %v168
  %170 = vdwg.mxu0
  %v171 = vadd.f32 %v57, %v169
  %v172 = vtanh.pop %v171
  %s173 = scalar_lea.vmem [#allocation2], 32
  %174 = vst.msk [vmem:[%s173] sm:$0xff] %vm65, %v172
  %v176 = vsel %vm65, %v172, 0
  %178 = vmatpush.msra.mxu0 0.0
  %179 = vmatpush.msra.mxu0 0.0
  %180 = vmatpush.msra.mxu0 0.0
  %181 = vmatpush.msra.mxu0 0.0
  %182 = vmatpush.msra.mxu0 0.0
  %183 = vmatpush.msra.mxu0 0.0
  %184 = vmatpush.msra.mxu0 0.0
  %185 = vmatpush.msra.mxu0 0.0
  %186 = vmatpush.msra.mxu0 0.0
  %187 = vmatpush.msra.mxu0 0.0
  %188 = vmatpush.msra.mxu0 0.0
  %189 = vmatpush.msra.mxu0 0.0
  %190 = vmatpush.msra.mxu0 %v62
  %191 = vmatpush.msra.mxu0 %v61
  %192 = vmatpush.msra.mxu0 %v60
  %193 = vmatpush.msra.mxu0 %v59
  %194 = vmatmul.f32.gmra.mxu0 %v176
  %v195 = vpop.f32.mrf.mxu0
  %v196 = vadd.f32 0.0, %v195
  %197 = vdwg.mxu0
  %v198 = vadd.f32 %v57, %v196
  %v199 = vtanh.pop %v198
  %s200 = scalar_lea.vmem [#allocation2], 40
  %201 = vst.msk [vmem:[%s200] sm:$0xff] %vm65, %v199
  %v203 = vsel %vm65, %v199, 0
  %205 = vmatpush.msra.mxu0 0.0
  %206 = vmatpush.msra.mxu0 0.0
  %207 = vmatpush.msra.mxu0 0.0
  %208 = vmatpush.msra.mxu0 0.0
  %209 = vmatpush.msra.mxu0 0.0
  %210 = vmatpush.msra.mxu0 0.0
  %211 = vmatpush.msra.mxu0 0.0
  %212 = vmatpush.msra.mxu0 0.0
  %213 = vmatpush.msra.mxu0 0.0
  %214 = vmatpush.msra.mxu0 0.0
  %215 = vmatpush.msra.mxu0 0.0
  %216 = vmatpush.msra.mxu0 0.0
  %217 = vmatpush.msra.mxu0 %v62
  %218 = vmatpush.msra.mxu0 %v61
  %219 = vmatpush.msra.mxu0 %v60
  %220 = vmatpush.msra.mxu0 %v59
  %221 = vmatmul.f32.gmra.mxu0 %v203
  %v222 = vpop.f32.mrf.mxu0
  %v223 = vadd.f32 0.0, %v222
  %224 = vdwg.mxu0
  %v225 = vadd.f32 %v57, %v223
  %v226 = vtanh.pop %v225
  %s227 = scalar_lea.vmem [#allocation2], 48
  %228 = vst.msk [vmem:[%s227] sm:$0xff] %vm65, %v226
  %v230 = vsel %vm65, %v226, 0
  %232 = vmatpush.msra.mxu0 0.0
  %233 = vmatpush.msra.mxu0 0.0
  %234 = vmatpush.msra.mxu0 0.0
  %235 = vmatpush.msra.mxu0 0.0
  %236 = vmatpush.msra.mxu0 0.0
  %237 = vmatpush.msra.mxu0 0.0
  %238 = vmatpush.msra.mxu0 0.0
  %239 = vmatpush.msra.mxu0 0.0
  %240 = vmatpush.msra.mxu0 0.0
  %241 = vmatpush.msra.mxu0 0.0
  %242 = vmatpush.msra.mxu0 0.0
  %243 = vmatpush.msra.mxu0 0.0
  %244 = vmatpush.msra.mxu0 %v62
  %245 = vmatpush.msra.mxu0 %v61
  %246 = vmatpush.msra.mxu0 %v60
  %247 = vmatpush.msra.mxu0 %v59
  %248 = vmatmul.f32.gmra.mxu0 %v230
  %v249 = vpop.f32.mrf.mxu0
  %v250 = vadd.f32 0.0, %v249
  %251 = vdwg.mxu0
  %v252 = vadd.f32 %v57, %v250
  %v253 = vtanh.pop %v252
  %s254 = scalar_lea.vmem [#allocation2], 56
  %255 = vst.msk [vmem:[%s254] sm:$0xff] %vm65, %v253
  %v256 = vld [vmem:[#allocation2] sm:$0xff]
  %v257 = vld [vmem:[#allocation2 + $0x8] sm:$0xff]
  %v258 = vld [vmem:[#allocation2 + $0x10] sm:$0xff]
  %v259 = vld [vmem:[#allocation2 + $0x18] sm:$0xff]
  %v260 = vld [vmem:[#allocation2 + $0x20] sm:$0xff]
  %v261 = vld [vmem:[#allocation2 + $0x28] sm:$0xff]
  %v262 = vld [vmem:[#allocation2 + $0x30] sm:$0xff]
  %v263 = vld [vmem:[#allocation2 + $0x38] sm:$0xff]
  %v264 = vld [vmem:[%s4] sm:$0xff]
  %v265 = vld [vmem:[%s4 + $0x8] sm:$0xff]
  %v266 = vld [vmem:[%s4 + $0x10] sm:$0xff]
  %v267 = vld [vmem:[%s4 + $0x18] sm:$0xff]
  %v268 = vld [vmem:[%s5] sm:$0x1]
  %v270 = vperm.slane %v268, 0
  %v273 = vsel %vm65, %v256, 0
  %v276 = vsel %vm65, %v257, 0
  %v279 = vsel %vm65, %v258, 0
  %v282 = vsel %vm65, %v259, 0
  %v285 = vsel %vm65, %v260, 0
  %v288 = vsel %vm65, %v261, 0
  %v291 = vsel %vm65, %v262, 0
  %v294 = vsel %vm65, %v263, 0
  %296 = vmatpush.msra.mxu0 0.0
  %297 = vmatpush.msra.mxu0 0.0
  %298 = vmatpush.msra.mxu0 0.0
  %299 = vmatpush.msra.mxu0 0.0
  %300 = vmatpush.msra.mxu0 0.0
  %301 = vmatpush.msra.mxu0 0.0
  %302 = vmatpush.msra.mxu0 0.0
  %303 = vmatpush.msra.mxu0 0.0
  %304 = vmatpush.msra.mxu0 0.0
  %305 = vmatpush.msra.mxu0 0.0
  %306 = vmatpush.msra.mxu0 0.0
  %307 = vmatpush.msra.mxu0 0.0
  %308 = vmatpush.msra.mxu0 %v267
  %309 = vmatpush.msra.mxu0 %v266
  %310 = vmatpush.msra.mxu0 %v265
  %311 = vmatpush.msra.mxu0 %v264
  %312 = vmatmul.f32.gmra.mxu0 %v273
  %v313 = vpop.f32.mrf.mxu0
  %v314 = vadd.f32 %v270, %v313
  %315 = vmatmul.f32.gmra.mxu0 %v276
  %v316 = vpop.f32.mrf.mxu0
  %v317 = vadd.f32 %v270, %v316
  %318 = vmatmul.f32.gmra.mxu0 %v279
  %v319 = vpop.f32.mrf.mxu0
  %v320 = vadd.f32 %v270, %v319
  %321 = vmatmul.f32.gmra.mxu0 %v282
  %v322 = vpop.f32.mrf.mxu0
  %v323 = vadd.f32 %v270, %v322
  %324 = vmatmul.f32.gmra.mxu0 %v285
  %v325 = vpop.f32.mrf.mxu0
  %v326 = vadd.f32 %v270, %v325
  %327 = vmatmul.f32.gmra.mxu0 %v288
  %v328 = vpop.f32.mrf.mxu0
  %v329 = vadd.f32 %v270, %v328
  %330 = vmatmul.f32.gmra.mxu0 %v291
  %v331 = vpop.f32.mrf.mxu0
  %v332 = vadd.f32 %v270, %v331
  %333 = vmatmul.f32.gmra.mxu0 %v294
  %v334 = vpop.f32.mrf.mxu0
  %v335 = vadd.f32 %v270, %v334
  %336 = vdwg.mxu0
  %v337 = vsub.f32 %v314, 5.0
  %v338 = vsub.f32 %v317, 5.0
  %v339 = vsub.f32 %v320, 5.0
  %v340 = vsub.f32 %v323, 5.0
  %v341 = vsub.f32 %v326, 5.0
  %v342 = vsub.f32 %v329, 5.0
  %v343 = vsub.f32 %v332, 5.0
  %v344 = vsub.f32 %v335, 5.0
  %v345 = vmax.f32 %v337, 0.0
  %v346 = vmax.f32 %v338, 0.0
  %v347 = vmax.f32 %v339, 0.0
  %v348 = vmax.f32 %v340, 0.0
  %v349 = vmax.f32 %v341, 0.0
  %v350 = vmax.f32 %v342, 0.0
  %v351 = vmax.f32 %v343, 0.0
  %v352 = vmax.f32 %v344, 0.0
  %vm353 = vcmp.ne.f32.partialorder %v337, %v337
  %vm354 = vcmp.ne.f32.partialorder %v338, %v338
  %vm355 = vcmp.ne.f32.partialorder %v339, %v339
  %vm356 = vcmp.ne.f32.partialorder %v340, %v340
  %vm357 = vcmp.ne.f32.partialorder %v341, %v341
  %vm358 = vcmp.ne.f32.partialorder %v342, %v342
  %vm359 = vcmp.ne.f32.partialorder %v343, %v343
  %vm360 = vcmp.ne.f32.partialorder %v344, %v344
  %v361 = vadd.f32 %v337, 0.0
  %v362 = vadd.f32 %v338, 0.0
  %v363 = vadd.f32 %v339, 0.0
  %v364 = vadd.f32 %v340, 0.0
  %v365 = vadd.f32 %v341, 0.0
  %v366 = vadd.f32 %v342, 0.0
  %v367 = vadd.f32 %v343, 0.0
  %v368 = vadd.f32 %v344, 0.0
  %v369 = vand.u32 2147483647, %v337
  %v370 = vand.u32 2147483647, %v338
  %v371 = vand.u32 2147483647, %v339
  %v372 = vand.u32 2147483647, %v340
  %v373 = vand.u32 2147483647, %v341
  %v374 = vand.u32 2147483647, %v342
  %v375 = vand.u32 2147483647, %v343
  %v376 = vand.u32 2147483647, %v344
  %v377 = vsub.f32 0.0, %v369
  %v378 = vsub.f32 0.0, %v370
  %v379 = vsub.f32 0.0, %v371
  %v380 = vsub.f32 0.0, %v372
  %v381 = vsub.f32 0.0, %v373
  %v382 = vsub.f32 0.0, %v374
  %v383 = vsub.f32 0.0, %v375
  %v384 = vsub.f32 0.0, %v376
  %v385 = vmul.f32 %v377, 1.442695
  %v386 = vpow.pop %v385
  %v387 = vmul.f32 %v378, 1.442695
  %v388 = vpow.pop %v387
  %v389 = vmul.f32 %v379, 1.442695
  %v390 = vpow.pop %v389
  %v391 = vmul.f32 %v380, 1.442695
  %v392 = vpow.pop %v391
  %v393 = vmul.f32 %v381, 1.442695
  %v394 = vpow.pop %v393
  %v395 = vmul.f32 %v382, 1.442695
  %v396 = vpow.pop %v395
  %v397 = vmul.f32 %v383, 1.442695
  %v398 = vpow.pop %v397
  %v399 = vmul.f32 %v384, 1.442695
  %v400 = vpow.pop %v399
  %v401 = vadd.f32 %v386, 1.0
  %v402 = vlog2.pop %v401
  %v403 = vmul.f32 %v402, 0.6931472
  %v404 = vmul.f32 -0.5, %v386
  %v405 = vadd.f32 %v404, 1.0
  %v406 = vmul.f32 %v405, %v386
  %v407 = vand.u32 2147483647, %v386
  %vm408 = vcmp.lt.f32.partialorder %v407, 0.0004427343
  %v409 = vsel %vm408, %v406, %v403
  %v410 = vadd.f32 %v388, 1.0
  %v411 = vlog2.pop %v410
  %v412 = vmul.f32 %v411, 0.6931472
  %v413 = vmul.f32 -0.5, %v388
  %v414 = vadd.f32 %v413, 1.0
  %v415 = vmul.f32 %v414, %v388
  %v416 = vand.u32 2147483647, %v388
  %vm417 = vcmp.lt.f32.partialorder %v416, 0.0004427343
  %v418 = vsel %vm417, %v415, %v412
  %v419 = vadd.f32 %v390, 1.0
  %v420 = vlog2.pop %v419
  %v421 = vmul.f32 %v420, 0.6931472
  %v422 = vmul.f32 -0.5, %v390
  %v423 = vadd.f32 %v422, 1.0
  %v424 = vmul.f32 %v423, %v390
  %v425 = vand.u32 2147483647, %v390
  %vm426 = vcmp.lt.f32.partialorder %v425, 0.0004427343
  %v427 = vsel %vm426, %v424, %v421
  %v428 = vadd.f32 %v392, 1.0
  %v429 = vlog2.pop %v428
  %v430 = vmul.f32 %v429, 0.6931472
  %v431 = vmul.f32 -0.5, %v392
  %v432 = vadd.f32 %v431, 1.0
  %v433 = vmul.f32 %v432, %v392
  %v434 = vand.u32 2147483647, %v392
  %vm435 = vcmp.lt.f32.partialorder %v434, 0.0004427343
  %v436 = vsel %vm435, %v433, %v430
  %v437 = vadd.f32 %v394, 1.0
  %v438 = vlog2.pop %v437
  %v439 = vmul.f32 %v438, 0.6931472
  %v440 = vmul.f32 -0.5, %v394
  %v441 = vadd.f32 %v440, 1.0
  %v442 = vmul.f32 %v441, %v394
  %v443 = vand.u32 2147483647, %v394
  %vm444 = vcmp.lt.f32.partialorder %v443, 0.0004427343
  %v445 = vsel %vm444, %v442, %v439
  %v446 = vadd.f32 %v396, 1.0
  %v447 = vlog2.pop %v446
  %v448 = vmul.f32 %v447, 0.6931472
  %v449 = vmul.f32 -0.5, %v396
  %v450 = vadd.f32 %v449, 1.0
  %v451 = vmul.f32 %v450, %v396
  %v452 = vand.u32 2147483647, %v396
  %vm453 = vcmp.lt.f32.partialorder %v452, 0.0004427343
  %v454 = vsel %vm453, %v451, %v448
  %v455 = vadd.f32 %v398, 1.0
  %v456 = vlog2.pop %v455
  %v457 = vmul.f32 %v456, 0.6931472
  %v458 = vmul.f32 -0.5, %v398
  %v459 = vadd.f32 %v458, 1.0
  %v460 = vmul.f32 %v459, %v398
  %v461 = vand.u32 2147483647, %v398
  %vm462 = vcmp.lt.f32.partialorder %v461, 0.0004427343
  %v463 = vsel %vm462, %v460, %v457
  %v464 = vadd.f32 %v400, 1.0
  %v465 = vlog2.pop %v464
  %v466 = vmul.f32 %v465, 0.6931472
  %v467 = vmul.f32 -0.5, %v400
  %v468 = vadd.f32 %v467, 1.0
  %v469 = vmul.f32 %v468, %v400
  %v470 = vand.u32 2147483647, %v400
  %vm471 = vcmp.lt.f32.partialorder %v470, 0.0004427343
  %v472 = vsel %vm471, %v469, %v466
  %v473 = vadd.f32 %v345, %v409
  %v474 = vadd.f32 %v346, %v418
  %v475 = vadd.f32 %v347, %v427
  %v476 = vadd.f32 %v348, %v436
  %v477 = vadd.f32 %v349, %v445
  %v478 = vadd.f32 %v350, %v454
  %v479 = vadd.f32 %v351, %v463
  %v480 = vadd.f32 %v352, %v472
  %v481 = vsel %vm353, %v361, %v473
  %v482 = vsel %vm354, %v362, %v474
  %v483 = vsel %vm355, %v363, %v475
  %v484 = vsel %vm356, %v364, %v476
  %v485 = vsel %vm357, %v365, %v477
  %v486 = vsel %vm358, %v366, %v478
  %v487 = vsel %vm359, %v367, %v479
  %v488 = vsel %vm360, %v368, %v480
  %v489 = vld [vmem:[%s6] sm:$0xff]
  %v490 = vld [vmem:[%s6 + $0x8] sm:$0xff]
  %v491 = vld [vmem:[%s6 + $0x10] sm:$0xff]
  %v492 = vld [vmem:[%s6 + $0x18] sm:$0xff]
  %v493 = vld [vmem:[%s6 + $0x20] sm:$0xff]
  %v494 = vld [vmem:[%s6 + $0x28] sm:$0xff]
  %v495 = vld [vmem:[%s6 + $0x30] sm:$0xff]
  %v496 = vld [vmem:[%s6 + $0x38] sm:$0xff]
  %505 = vrot.lane.b32.xlu0 %v481, 124
  %v506 = vpop.permute.xlu0 %505
  %507 = vrot.lane.b32.xlu0 %v482, 124
  %v508 = vpop.permute.xlu0 %507
  %509 = vrot.lane.b32.xlu0 %v483, 124
  %v510 = vpop.permute.xlu0 %509
  %511 = vrot.lane.b32.xlu0 %v484, 124
  %v512 = vpop.permute.xlu0 %511
  %513 = vrot.lane.b32.xlu0 %v485, 124
  %v514 = vpop.permute.xlu0 %513
  %515 = vrot.lane.b32.xlu0 %v486, 124
  %v516 = vpop.permute.xlu0 %515
  %517 = vrot.lane.b32.xlu0 %v487, 124
  %v518 = vpop.permute.xlu0 %517
  %519 = vrot.lane.b32.xlu0 %v488, 124
  %v520 = vpop.permute.xlu0 %519
  %v529 = vmul.f32 %v489, %v506
  %v530 = vmul.f32 %v490, %v508
  %v531 = vmul.f32 %v491, %v510
  %v532 = vmul.f32 %v492, %v512
  %v533 = vmul.f32 %v493, %v514
  %v534 = vmul.f32 %v494, %v516
  %v535 = vmul.f32 %v495, %v518
  %v536 = vmul.f32 %v496, %v520
  %v537 = vadd.f32 %v529, %v314
  %v538 = vadd.f32 %v530, %v317
  %v539 = vadd.f32 %v531, %v320
  %v540 = vadd.f32 %v532, %v323
  %v541 = vadd.f32 %v533, %v326
  %v542 = vadd.f32 %v534, %v329
  %v543 = vadd.f32 %v535, %v332
  %v544 = vadd.f32 %v536, %v335
  %vm545 = vcmask 31744
  %546 = vst.msk [vmem:[%s7] sm:$0xff] %vm545, %v537
  %547 = vst.msk [vmem:[%s7 + $0x8] sm:$0xff] %vm545, %v538
  %548 = vst.msk [vmem:[%s7 + $0x10] sm:$0xff] %vm545, %v539
  %549 = vst.msk [vmem:[%s7 + $0x18] sm:$0xff] %vm545, %v540
  %550 = vst.msk [vmem:[%s7 + $0x20] sm:$0xff] %vm545, %v541
  %551 = vst.msk [vmem:[%s7 + $0x28] sm:$0xff] %vm545, %v542
  %552 = vst.msk [vmem:[%s7 + $0x30] sm:$0xff] %vm545, %v543
  %553 = vst.msk [vmem:[%s7 + $0x38] sm:$0xff] %vm545, %v544
  %562 = vrot.lane.b32.xlu0 %v314, 4
  %v563 = vpop.permute.xlu0 %562
  %564 = vrot.lane.b32.xlu0 %v317, 4
  %v565 = vpop.permute.xlu0 %564
  %566 = vrot.lane.b32.xlu0 %v320, 4
  %v567 = vpop.permute.xlu0 %566
  %568 = vrot.lane.b32.xlu0 %v323, 4
  %v569 = vpop.permute.xlu0 %568
  %570 = vrot.lane.b32.xlu0 %v326, 4
  %v571 = vpop.permute.xlu0 %570
  %572 = vrot.lane.b32.xlu0 %v329, 4
  %v573 = vpop.permute.xlu0 %572
  %574 = vrot.lane.b32.xlu0 %v332, 4
  %v575 = vpop.permute.xlu0 %574
  %576 = vrot.lane.b32.xlu0 %v335, 4
  %v577 = vpop.permute.xlu0 %576
  %vm586 = vcmask 64544
  %587 = vst.msk [vmem:[%s7] sm:$0xff] %vm586, %v563
  %588 = vst.msk [vmem:[%s7 + $0x8] sm:$0xff] %vm586, %v565
  %589 = vst.msk [vmem:[%s7 + $0x10] sm:$0xff] %vm586, %v567
  %590 = vst.msk [vmem:[%s7 + $0x18] sm:$0xff] %vm586, %v569
  %591 = vst.msk [vmem:[%s7 + $0x20] sm:$0xff] %vm586, %v571
  %592 = vst.msk [vmem:[%s7 + $0x28] sm:$0xff] %vm586, %v573
  %593 = vst.msk [vmem:[%s7 + $0x30] sm:$0xff] %vm586, %v575
  %594 = vst.msk [vmem:[%s7 + $0x38] sm:$0xff] %vm586, %v577
  %595 = vrot.lane.b32.xlu0 %v481, 4
  %v596 = vpop.permute.xlu0 %595
  %597 = vrot.lane.b32.xlu0 %v482, 4
  %v598 = vpop.permute.xlu0 %597
  %599 = vrot.lane.b32.xlu0 %v483, 4
  %v600 = vpop.permute.xlu0 %599
  %601 = vrot.lane.b32.xlu0 %v484, 4
  %v602 = vpop.permute.xlu0 %601
  %603 = vrot.lane.b32.xlu0 %v485, 4
  %v604 = vpop.permute.xlu0 %603
  %605 = vrot.lane.b32.xlu0 %v486, 4
  %v606 = vpop.permute.xlu0 %605
  %607 = vrot.lane.b32.xlu0 %v487, 4
  %v608 = vpop.permute.xlu0 %607
  %609 = vrot.lane.b32.xlu0 %v488, 4
  %v610 = vpop.permute.xlu0 %609
  %vm619 = vcmask 97344
  %620 = vst.msk [vmem:[%s7] sm:$0xff] %vm619, %v596
  %621 = vst.msk [vmem:[%s7 + $0x8] sm:$0xff] %vm619, %v598
  %622 = vst.msk [vmem:[%s7 + $0x10] sm:$0xff] %vm619, %v600
  %623 = vst.msk [vmem:[%s7 + $0x18] sm:$0xff] %vm619, %v602
  %624 = vst.msk [vmem:[%s7 + $0x20] sm:$0xff] %vm619, %v604
  %625 = vst.msk [vmem:[%s7 + $0x28] sm:$0xff] %vm619, %v606
  %626 = vst.msk [vmem:[%s7 + $0x30] sm:$0xff] %vm619, %v608
  %627 = vst.msk [vmem:[%s7 + $0x38] sm:$0xff] %vm619, %v610
  %v628 = vld [vmem:[%s254] sm:$0xff]
  %629 = vst.msk [vmem:[%s8] sm:$0xff] %vm65, %v628
  // Predicated region
  $region30: #{recurrent_encoder_forward.1} parent=0 // pred_check
    _
  $region31: #{recurrent_encoder_forward.1} parent=0 // pred_check_branch
    %631 = sbr.rel (0) target = $region33
  $region32: #{recurrent_encoder_forward.1} parent=0 // pred_region
    _
  $region33: #{recurrent_encoder_forward.1} parent=0 // pred_fallthru
    _
  // Predicated region
  $region34: #{recurrent_encoder_forward.1} parent=0 // pred_check
    _
  $region35: #{recurrent_encoder_forward.1} parent=0 // pred_check_branch
    %633 = sbr.rel (0) target = $region37
  $region36: #{recurrent_encoder_forward.1} parent=0 // pred_region
    _
  $region37: #{recurrent_encoder_forward.1} parent=0 // pred_fallthru
    _
  // Predicated region
  $region38: #{recurrent_encoder_forward.1} parent=0 // pred_check
    _
  $region39: #{recurrent_encoder_forward.1} parent=0 // pred_check_branch
    %635 = sbr.rel (0) target = $region41
  $region40: #{recurrent_encoder_forward.1} parent=0 // pred_region
    _
  $region41: #{recurrent_encoder_forward.1} parent=0 // pred_fallthru
    _
  // Predicated region
  $region42: #{recurrent_encoder_forward.1} parent=0 // pred_check
    _
  $region43: #{recurrent_encoder_forward.1} parent=0 // pred_check_branch
    %637 = sbr.rel (0) target = $region45
  $region44: #{recurrent_encoder_forward.1} parent=0 // pred_region
    _
  $region45: #{recurrent_encoder_forward.1} parent=0 // pred_fallthru
    _

</llo_original>
